<compile_context>
chip_gen: v7x
topology: tpu7x:2x2x1
jax: 0.10.0
libtpu: 0.0.40
codegen_flags: <defaults>
</compile_context>

<pallas_src>
import functools

import jax
import jax.numpy as jnp
from jax.experimental import pallas as pl
from jax.experimental.pallas import tpu as pltpu


def _round_up(x, m):
    return ((x + m - 1) // m) * m


def _concat_model_kernel(px_ref, w_ref, b_ref, out_ref, acc_ref, *, inv_hw):
    """Grid = (batch_blocks, spatial_blocks); the spatial axis is a reduction.

    px_ref : (TB, C, TS_SL, 128) or (TB, C, S)  pixel tile (input dtype, e.g. bf16)
    w_ref  : (C, N_PAD)  f32  fused (proj_r|proj_o -> concat -> clf) weight
    b_ref  : (1, N_PAD)  f32  fused bias
    out_ref: (TB, N_PAD) f32  logits (lane padded), resident across the spatial axis
    acc_ref: (TB, C)     f32  running spatial-sum accumulator
    """
    s = pl.program_id(1)

    @pl.when(s == 0)
    def _():
        acc_ref[...] = jnp.zeros_like(acc_ref)

    # Accumulate the per-channel spatial sum in f32 (hides under the px DMA).
    x = px_ref[...].astype(jnp.float32)
    while x.ndim > 2:                       # static trip count: reduce trailing axes
        x = jnp.sum(x, axis=-1)
    acc_ref[...] += x

    @pl.when(s == pl.num_programs(1) - 1)
    def _():
        pooled = acc_ref[...] * inv_hw      # single scale at finalize (true 1/(H*W))
        out_ref[...] = (
            jnp.dot(pooled, w_ref[...], preferred_element_type=jnp.float32)
            + b_ref[...]
        )


def concat_model_forward(pixel_values, params, *, tb=8, block_spatial=32768):
    """pixel_values: (B, C, H, W) f32 or bf16 (NCHW). Returns (B, 5) f32 logits."""
    B, C, H, W = pixel_values.shape
    S = H * W

    w_r, b_r, w_o, b_o, w_c, b_c = params
    num_classes = w_c.shape[1]
    assert w_c.shape[0] == w_r.shape[1] + w_o.shape[1]   # classifier_size

    # ---- Host-side constant folding (exact: everything after GAP is affine) ----
    #   clf(cat(pooled@Wr + br, pooled@Wo + bo))
    #     == pooled @ (cat(Wr, Wo, axis=1) @ Wc) + (cat(br, bo, axis=1) @ Wc + bc)
    w_fused = jnp.concatenate([w_r, w_o], axis=1).astype(jnp.float32) @ w_c  # (C, 5)
    b_fused = (jnp.concatenate([b_r, b_o], axis=1).astype(jnp.float32) @ w_c
               + b_c)                                                        # (1, 5)

    # Lane-dense output: pad classes 5 -> 128 (tiny), sliced back after the call.
    n_pad = _round_up(num_classes, 128)
    w_pad = jnp.zeros((C, n_pad), jnp.float32).at[:, :num_classes].set(w_fused)
    b_pad = jnp.zeros((1, n_pad), jnp.float32).at[:, :num_classes].set(b_fused)

    # ---- Batch tiling (NO input padding; a ragged batch tail is allowed: the
    #      out-of-bounds rows read unspecified data that only feeds rows we slice
    #      off at the end) ---------------------------------------------------------
    tb = max(1, int(tb))
    if tb >= B:
        tb = B                             # single batch block (== full dim -> OK)
    else:
        tb = max(8, (tb // 8) * 8)         # multi-block: output sublane alignment
        if tb >= B:
            tb = B
    # v7x megacore: give both TensorCores work when the batch is large enough.
    if tb == B and B >= 16:
        tb = max(8, (((B + 1) // 2) // 8) * 8)
    grid_b = pl.cdiv(B, tb)
    n_rows = grid_b * tb                   # output rows (extra rows sliced off)

    # ---- Spatial tiling: lane-dense (B, C, S//128, 128) layout (free reshape) ---
    px = pixel_values.reshape(B, C, S)     # contiguous reshape: no HBM pass
    if S % 128 == 0:
        sl_total = S // 128
        target_sl = max(1, block_spatial // 128)
        if sl_total <= target_sl:
            ts_sl = sl_total
        else:
            ts_sl = sl_total               # fallback: single spatial block
            d = (target_sl // 8) * 8
            while d >= 8:                  # largest 8-aligned divisor <= target
                if sl_total % d == 0:
                    ts_sl = d
                    break
                d -= 8
        grid_s = sl_total // ts_sl
        px = px.reshape(B, C, sl_total, 128)   # still a free reshape
        px_spec = pl.BlockSpec((tb, C, ts_sl, 128), lambda b, s: (b, 0, s, 0))
        px_block_elems = tb * C * ts_sl * 128
    else:
        # Odd spatial size: one full-extent spatial block per batch block (no pad).
        grid_s = 1
        px_spec = pl.BlockSpec((tb, C, S), lambda b, s: (b, 0, s))
        px_block_elems = tb * C * S

    # ---- VMEM budget / compiler params ------------------------------------------
    px_block_bytes = px_block_elems * px.dtype.itemsize
    fixed_bytes = (C * n_pad + n_pad + tb * n_pad) * 4
    est_vmem = 2 * px_block_bytes + 2 * fixed_bytes + 8 * 128 * 4
    vmem_limit = None
    if est_vmem > (16 << 20):              # above the v5e scoped default
        # NOTE: on v7x (64 MiB physical VMEM) pick tb/block_spatial so the
        # double-buffered stream stays comfortably below ~48 MiB.
        vmem_limit = int(min(est_vmem * 5 // 4, 96 << 20))

    cost = pl.CostEstimate(
        flops=int(B * C * S + 2 * n_rows * C * n_pad),
        transcendentals=0,
        bytes_accessed=int(px.size * px.dtype.itemsize
                           + (w_pad.size + b_pad.size + n_rows * n_pad) * 4),
    )

    kernel = functools.partial(_concat_model_kernel, inv_hw=1.0 / float(S))

    out = pl.pallas_call(
        kernel,
        out_shape=jax.ShapeDtypeStruct((n_rows, n_pad), jnp.float32),
        grid_spec=pltpu.PrefetchScalarGridSpec(
            num_scalar_prefetch=0,
            grid=(grid_b, grid_s),
            in_specs=[
                px_spec,
                # Constant index maps: weights/bias are DMA'd once, not per step.
                pl.BlockSpec((C, n_pad), lambda b, s: (0, 0)),
                pl.BlockSpec((1, n_pad), lambda b, s: (0, 0)),
            ],
            out_specs=pl.BlockSpec((tb, n_pad), lambda b, s: (b, 0)),
            scratch_shapes=[pltpu.VMEM((tb, C), jnp.float32)],
        ),
        compiler_params=pltpu.CompilerParams(
            dimension_semantics=("parallel", "arbitrary"),
            vmem_limit_bytes=vmem_limit,
        ),
        cost_estimate=cost,
    )(px, w_pad, b_pad)

    return out[:B, :num_classes]


def make_params(key, in_channels, hidden_resnet, hidden_obj, num_classes=5):
    """Deterministic synthetic parameters (PyTorch-Linear-style uniform init)."""
    # TODO(synk): the real pretrained `resnet` / `object_detector` backbones are
    # external black boxes; they are modelled here as GAP + linear projections.
    ks = jax.random.split(key, 6)

    def lin(kw, kb, fan_in, fan_out):
        bound = 1.0 / jnp.sqrt(jnp.float32(fan_in))
        w = jax.random.uniform(kw, (fan_in, fan_out), jnp.float32, -bound, bound)
        b = jax.random.uniform(kb, (1, fan_out), jnp.float32, -bound, bound)
        return w, b

    w_r, b_r = lin(ks[0], ks[1], in_channels, hidden_resnet)
    w_o, b_o = lin(ks[2], ks[3], in_channels, hidden_obj)
    w_c, b_c = lin(ks[4], ks[5], hidden_resnet + hidden_obj, num_classes)
    return (w_r, b_r, w_o, b_o, w_c, b_c)


def reference_forward(pixel_values_f32, params):
    """Pure-JAX reference of the ORIGINAL (unfused) forward pass, in f32."""
    w_r, b_r, w_o, b_o, w_c, b_c = params
    pooled = jnp.mean(pixel_values_f32, axis=(2, 3))       # (B, C)
    resnet_embed = pooled @ w_r + b_r
    object_embed = pooled @ w_o + b_o
    embeddings = jnp.concatenate([resnet_embed, object_embed], axis=1)
    return embeddings @ w_c + b_c


if __name__ == "__main__":
    key = jax.random.PRNGKey(0)
    k1, k2, k3, k4 = jax.random.split(key, 4)

    # --- Test 1: toy spec shape; bf16 pixel stream, single spatial block -------
    B, C, H, W = 2, 4, 16, 16
    hidden_resnet, hidden_obj = 32, 32
    pixel_values = jax.random.normal(k1, (B, C, H, W), jnp.float32).astype(jnp.bfloat16)
    params = make_params(k2, C, hidden_resnet, hidden_obj, num_classes=5)

    logits = jax.block_until_ready(concat_model_forward(pixel_values, params))
    ref = reference_forward(pixel_values.astype(jnp.float32), params)
    assert logits.shape == (B, 5)
    assert jnp.allclose(logits, ref, atol=1e-4, rtol=1e-4)

    # --- Test 2: larger spatial extent exercising the multi-step accumulate ----
    B2, C2, H2, W2 = 2, 3, 64, 64
    px2 = jax.random.normal(k3, (B2, C2, H2, W2), jnp.float32).astype(jnp.bfloat16)
    params2 = make_params(k4, C2, 16, 48, num_classes=5)

    logits2 = jax.block_until_ready(
        concat_model_forward(px2, params2, tb=8, block_spatial=2048))
    ref2 = reference_forward(px2.astype(jnp.float32), params2)
    assert logits2.shape == (B2, 5)
    assert jnp.allclose(logits2, ref2, atol=1e-4, rtol=1e-4)

    print("KERNEL_OK")
</pallas_src>

<mosaic_0001>
module attributes {stable_mosaic.version = 11 : i64} {
  func.func @_concat_model_kernel(%arg0: i32, %arg1: i32, %arg2: memref<2x4x2x128xbf16, #tpu.memory_space<vmem>>, %arg3: memref<4x128xf32, #tpu.memory_space<vmem>>, %arg4: memref<1x128xf32, #tpu.memory_space<vmem>>, %arg5: memref<2x128xf32, #tpu.memory_space<vmem>>, %arg6: memref<2x4xf32, #tpu.memory_space<vmem>>) attributes {dimension_semantics = [#tpu.dimension_semantics<parallel>, #tpu.dimension_semantics<arbitrary>], iteration_bounds = array<i64: 1, 1>, scalar_prefetch = 0 : i64, scratch_operands = 1 : i64, tpu.core_type = #tpu.core_type<tc>, window_params = [{transform_indices = @transform_0, window_bounds = array<i64: 2, 4, 2, 128>}, {pipeline_mode = #tpu.pipeline_mode<synchronous>, transform_indices = @transform_1, window_bounds = array<i64: 4, 128>}, {pipeline_mode = #tpu.pipeline_mode<synchronous>, transform_indices = @transform_2, window_bounds = array<i64: 1, 128>}, {transform_indices = @transform_3, window_bounds = array<i64: 2, 128>}]} {
    %c0_i32 = arith.constant 0 : i32
    %0 = arith.cmpi eq, %arg1, %c0_i32 : i32
    %1 = arith.extui %0 : i1 to i32
    %c0_i32_0 = arith.constant 0 : i32
    %2 = arith.cmpi ne, %1, %c0_i32_0 : i32
    scf.if %2 {
      %cst_11 = arith.constant 0.000000e+00 : f32
      %13 = vector.broadcast %cst_11 : f32 to vector<2x4xf32>
      %c0_12 = arith.constant 0 : index
      %c0_13 = arith.constant 0 : index
      %14 = vector.load %arg6[%c0_12, %c0_13] : memref<2x4xf32, #tpu.memory_space<vmem>>, vector<2x4xf32>
      tpu.vector_store %arg6[%c0_12, %c0_13], %13 {strides = array<i32>} : memref<2x4xf32, #tpu.memory_space<vmem>>, vector<2x4xf32>,
    } else {
    }
    %c0 = arith.constant 0 : index
    %c0_1 = arith.constant 0 : index
    %c0_2 = arith.constant 0 : index
    %c0_3 = arith.constant 0 : index
    %3 = vector.load %arg2[%c0, %c0_1, %c0_2, %c0_3] : memref<2x4x2x128xbf16, #tpu.memory_space<vmem>>, vector<2x4x2x128xbf16>
    %4 = arith.extf %3 : vector<2x4x2x128xbf16> to vector<2x4x2x128xf32>
    %cst = arith.constant dense<0.000000e+00> : vector<2x4x2xf32>
    %5 = vector.multi_reduction <add>, %4, %cst [3] : vector<2x4x2x128xf32> to vector<2x4x2xf32>
    %cst_4 = arith.constant dense<0.000000e+00> : vector<2x4xf32>
    %6 = vector.multi_reduction <add>, %5, %cst_4 [2] : vector<2x4x2xf32> to vector<2x4xf32>
    %c0_5 = arith.constant 0 : index
    %c0_6 = arith.constant 0 : index
    %7 = vector.load %arg6[%c0_5, %c0_6] : memref<2x4xf32, #tpu.memory_space<vmem>>, vector<2x4xf32>
    %8 = arith.addf %7, %6 : vector<2x4xf32>
    %c0_7 = arith.constant 0 : index
    %c0_8 = arith.constant 0 : index
    %9 = vector.load %arg6[%c0_7, %c0_8] : memref<2x4xf32, #tpu.memory_space<vmem>>, vector<2x4xf32>
    tpu.vector_store %arg6[%c0_7, %c0_8], %8 {strides = array<i32>} : memref<2x4xf32, #tpu.memory_space<vmem>>, vector<2x4xf32>,
    %c0_i32_9 = arith.constant 0 : i32
    %10 = arith.cmpi eq, %arg1, %c0_i32_9 : i32
    %11 = arith.extui %10 : i1 to i32
    %c0_i32_10 = arith.constant 0 : i32
    %12 = arith.cmpi ne, %11, %c0_i32_10 : i32
    scf.if %12 {
      %c0_11 = arith.constant 0 : index
      %c0_12 = arith.constant 0 : index
      %13 = vector.load %arg6[%c0_11, %c0_12] : memref<2x4xf32, #tpu.memory_space<vmem>>, vector<2x4xf32>
      %cst_13 = arith.constant 3.906250e-03 : f32
      %14 = vector.broadcast %cst_13 : f32 to vector<2x4xf32>
      %15 = arith.mulf %13, %14 : vector<2x4xf32>
      %c0_14 = arith.constant 0 : index
      %c0_15 = arith.constant 0 : index
      %16 = vector.load %arg3[%c0_14, %c0_15] : memref<4x128xf32, #tpu.memory_space<vmem>>, vector<4x128xf32>
      %cst_16 = arith.constant dense<0.000000e+00> : vector<2x128xf32>
      %17 = tpu.matmul %15, %16, %cst_16 {dimension_numbers = #tpu.dot_dimension_numbers<[1], [0], [0], [1], [0, 0, 1, 1], [], []>} : vector<2x4xf32>, vector<4x128xf32>, vector<2x128xf32> -> vector<2x128xf32>
      %c0_17 = arith.constant 0 : index
      %c0_18 = arith.constant 0 : index
      %18 = vector.load %arg4[%c0_17, %c0_18] : memref<1x128xf32, #tpu.memory_space<vmem>>, vector<1x128xf32>
      %19 = vector.broadcast %18 : vector<1x128xf32> to vector<2x128xf32>
      %20 = arith.addf %17, %19 : vector<2x128xf32>
      %c0_19 = arith.constant 0 : index
      %c0_20 = arith.constant 0 : index
      %21 = vector.load %arg5[%c0_19, %c0_20] : memref<2x128xf32, #tpu.memory_space<vmem>>, vector<2x128xf32>
      tpu.vector_store %arg5[%c0_19, %c0_20], %20 {strides = array<i32>} : memref<2x128xf32, #tpu.memory_space<vmem>>, vector<2x128xf32>,
    } else {
    }
    return
  }
  func.func @transform_0(%arg0: i32, %arg1: i32) -> (i32, i32, i32, i32) {
    %c0_i32 = arith.constant 0 : i32
    %c0_i32_0 = arith.constant 0 : i32
    %c0_i32_1 = arith.constant 0 : i32
    return %arg0, %c0_i32, %arg1, %c0_i32_0 : i32, i32, i32, i32
  }
  func.func @transform_1(%arg0: i32, %arg1: i32) -> (i32, i32) {
    %c0_i32 = arith.constant 0 : i32
    %c0_i32_0 = arith.constant 0 : i32
    %c0_i32_1 = arith.constant 0 : i32
    return %c0_i32, %c0_i32_0 : i32, i32
  }
  func.func @transform_2(%arg0: i32, %arg1: i32) -> (i32, i32) {
    %c0_i32 = arith.constant 0 : i32
    %c0_i32_0 = arith.constant 0 : i32
    %c0_i32_1 = arith.constant 0 : i32
    return %c0_i32, %c0_i32_0 : i32, i32
  }
  func.func @transform_3(%arg0: i32, %arg1: i32) -> (i32, i32) {
    %c0_i32 = arith.constant 0 : i32
    %c0_i32_0 = arith.constant 0 : i32
    return %arg0, %c0_i32 : i32, i32
  }
}

</mosaic_0001>

<llo_original>
// kernel: tpu_custom_call.1
$region0: #{tpu_custom_call.1}
  #allocation0 [shape = 'u32[]', space=smem, size = 0x4, offset = 0x4, fixed_abs, tag = 'smem constant byte address 0x4 - core index']
  #allocation1 [shape = 'u32[144,128]{1,0:T(1,128)}', space=vmem, size = 0x12000, scoped, tag = 'internal scratch']
  #allocation2 [shape = 'f32[2,4]{1,0:T(2,128)}', space=vmem, size = 0x400, scoped, tag = 'scratch operand']
  %s0 = inlined_call_operand.hbm [shape: bf16[2,4,2,128], index: 0, kind: input, shape index: {}]
  %s1 = inlined_call_operand.hbm [shape: f32[4,128], index: 1, kind: input, shape index: {}]
  %s2 = inlined_call_operand.vmem [shape: f32[1,128], index: 2, kind: input, shape index: {}]
  %s3 = inlined_call_operand.hbm [shape: f32[2,128], index: 3, kind: output, shape index: {}]
  %s4 = sld [smem:[#allocation0]]
  $region38: #{tpu_custom_call.1} parent=0
    _
  %s6 = ssub.s32 1, %s4
  %s7 = scalar_select 0, %s6, %s4
  $region1: #{tpu_custom_call.1} parent=0
    #allocation3 [shape = 'u8[4096]{0}', space=vmem, size = 0x1000, scoped, tag = 'input window, operand 0, single buffered']
    #allocation4 [shape = 's32[1]{0}', space=sflag, size = 0x4, scoped, tag = 'scoped memory for tpu_custom_call.1']
    #allocation5 [shape = 's32[1]{0}', space=sflag, size = 0x4, scoped, tag = 'scoped memory for tpu_custom_call.1']
    #allocation6 [shape = 'u8[2048]{0}', space=vmem, size = 0x800, scoped, tag = 'input window, operand 1, single buffered']
    #allocation7 [shape = 's32[1]{0}', space=sflag, size = 0x4, scoped, tag = 'scoped memory for tpu_custom_call.1']
    #allocation8 [shape = 'u8[1024]{0}', space=vmem, size = 0x400, scoped, tag = 'output window, operand 0, single buffered']
    %8 = vsyncpa [#allocation4], 0
    %9 = vsyncpa [#allocation7], 0
    %10 = vsyncpa [#allocation5], 0
    // Predicated region
    $region2: #{tpu_custom_call.1} parent=1 // pred_check
      _
    $region3: #{tpu_custom_call.1} parent=1 // pred_check_branch
      %12 = sbr.rel (0) target = $region5
    $region4: #{tpu_custom_call.1} parent=1 // pred_region
      %s14 = ssub.s32 128, 128
      %15 = vsyncadd [#allocation4], %s14
      %s16 = sshll.u32 [#allocation3], 4
      %s17 = int_to_ptr.vmem [resolvable:$true] %s16
      %22 = dma.hbm_to_vmem [thread:$0]  %s0, 128, %s17, [#allocation4], 16, 16, 1
    $region5: #{tpu_custom_call.1} parent=1 // pred_fallthru
      _
    // Predicated region
    $region6: #{tpu_custom_call.1} parent=1 // pred_check
      _
    $region7: #{tpu_custom_call.1} parent=1 // pred_check_branch
      %24 = sbr.rel (0) target = $region9
    $region8: #{tpu_custom_call.1} parent=1 // pred_region
      %s26 = ssub.s32 64, 64
      %27 = vsyncadd [#allocation7], %s26
      %s29 = sshll.u32 [#allocation6], 4
      %s30 = int_to_ptr.vmem [resolvable:$true] %s29
      %32 = dma.hbm_to_vmem [thread:$0]  %s1, 64, %s30, [#allocation7]
    $region9: #{tpu_custom_call.1} parent=1 // pred_fallthru
      _
    // Predicated region
    $region10: #{tpu_custom_call.1} parent=1 // pred_check
      _
    $region11: #{tpu_custom_call.1} parent=1 // pred_check_branch
      %34 = sbr.rel (0) target = $region13
    $region12: #{tpu_custom_call.1} parent=1 // pred_region
      _
    $region13: #{tpu_custom_call.1} parent=1 // pred_fallthru
      _
    // Predicated region
    $region14: #{tpu_custom_call.1} parent=1 // pred_check
      _
    $region15: #{tpu_custom_call.1} parent=1 // pred_check_branch
      %36 = sbr.rel (0) target = $region17
    $region16: #{tpu_custom_call.1} parent=1 // pred_region
      %37 = dma.done [#allocation4], 128
    $region17: #{tpu_custom_call.1} parent=1 // pred_fallthru
      _
    // Predicated region
    $region18: #{tpu_custom_call.1} parent=1 // pred_check
      _
    $region19: #{tpu_custom_call.1} parent=1 // pred_check_branch
      %39 = sbr.rel (0) target = $region21
    $region20: #{tpu_custom_call.1} parent=1 // pred_region
      %40 = dma.done [#allocation7], 64
    $region21: #{tpu_custom_call.1} parent=1 // pred_fallthru
      _
    %p41 = scmp.eq.s32.totalorder 0, 0
    // Predicated region
    $region22: #{tpu_custom_call.1} parent=1 // pred_check
      %p42 = pneg %p41
    $region23: #{tpu_custom_call.1} parent=1 // pred_check_branch
      %44 = sbr.rel (%p42) target = $region25
    $region24: #{tpu_custom_call.1} parent=1 // pred_region
      %vm45 = vcmask 25600
      %46 = vst.msk [vmem:[#allocation2] sm:$0x3] %vm45, 0.0
    $region25: #{tpu_custom_call.1} parent=1 // pred_fallthru
      _
    %v47 = vld [vmem:[#allocation3] sm:$0x1]
    %v48 = vld [vmem:[#allocation3 + $0x1] sm:$0x1]
    %v49 = vld [vmem:[#allocation3 + $0x2] sm:$0x1]
    %v50 = vld [vmem:[#allocation3 + $0x3] sm:$0x1]
    %v51 = vld [vmem:[#allocation3 + $0x4] sm:$0x1]
    %v52 = vld [vmem:[#allocation3 + $0x5] sm:$0x1]
    %v53 = vld [vmem:[#allocation3 + $0x6] sm:$0x1]
    %v54 = vld [vmem:[#allocation3 + $0x7] sm:$0x1]
    %v55 = vunpack.c.l.bf16 %v47
    %v56 = vunpack.c.l.bf16 %v48
    %v57 = vunpack.c.l.bf16 %v49
    %v58 = vunpack.c.l.bf16 %v50
    %v59 = vunpack.c.l.bf16 %v51
    %v60 = vunpack.c.l.bf16 %v52
    %v61 = vunpack.c.l.bf16 %v53
    %v62 = vunpack.c.l.bf16 %v54
    %vm63 = vcmask 1041408
    %v64 = vsel %vm63, %v55, 0.0
    %65 = vadd.xlane.f32.xlu0 %v64
    %v66 = vpop.xlane.xlu0 %65
    %v67 = vsel %vm63, %v56, 0.0
    %68 = vadd.xlane.f32.xlu0 %v67
    %v69 = vpop.xlane.xlu0 %68
    %v70 = vsel %vm63, %v57, 0.0
    %71 = vadd.xlane.f32.xlu0 %v70
    %v72 = vpop.xlane.xlu0 %71
    %v73 = vsel %vm63, %v58, 0.0
    %74 = vadd.xlane.f32.xlu0 %v73
    %v75 = vpop.xlane.xlu0 %74
    %v76 = vsel %vm63, %v59, 0.0
    %77 = vadd.xlane.f32.xlu0 %v76
    %v78 = vpop.xlane.xlu0 %77
    %v79 = vsel %vm63, %v60, 0.0
    %80 = vadd.xlane.f32.xlu0 %v79
    %v81 = vpop.xlane.xlu0 %80
    %v82 = vsel %vm63, %v61, 0.0
    %83 = vadd.xlane.f32.xlu0 %v82
    %v84 = vpop.xlane.xlu0 %83
    %v85 = vsel %vm63, %v62, 0.0
    %86 = vadd.xlane.f32.xlu0 %v85
    %v87 = vpop.xlane.xlu0 %86
    %v96 = vlaneseq
    %v97 = vand.u32 %v96, 127
    %v98 = vlaneseq
    %v99 = vshrl.u32 %v98, 7
    %v100 = vsub.s32 %v97, %v99
    %v101 = vrot.slane %v66, %v100
    %v102 = vlaneseq
    %v103 = vshrl.u32 %v102, 7
    %v104 = vsub.s32 %v97, %v103
    %v105 = vrot.slane %v69, %v104
    %v106 = vlaneseq
    %v107 = vshrl.u32 %v106, 7
    %v108 = vsub.s32 %v97, %v107
    %v109 = vrot.slane %v72, %v108
    %v110 = vlaneseq
    %v111 = vshrl.u32 %v110, 7
    %v112 = vsub.s32 %v97, %v111
    %v113 = vrot.slane %v75, %v112
    %v114 = vlaneseq
    %v115 = vshrl.u32 %v114, 7
    %v116 = vsub.s32 %v97, %v115
    %v117 = vrot.slane %v78, %v116
    %v118 = vlaneseq
    %v119 = vshrl.u32 %v118, 7
    %v120 = vsub.s32 %v97, %v119
    %v121 = vrot.slane %v81, %v120
    %v122 = vlaneseq
    %v123 = vshrl.u32 %v122, 7
    %v124 = vsub.s32 %v97, %v123
    %v125 = vrot.slane %v84, %v124
    %v126 = vlaneseq
    %v127 = vshrl.u32 %v126, 7
    %v128 = vsub.s32 %v97, %v127
    %v129 = vrot.slane %v87, %v128
    %vm130 = vcmask 1041409
    %v131 = vsel %vm130, %v105, %v101
    %vm132 = vcmask 1042434
    %v133 = vsel %vm132, %v109, %v131
    %vm134 = vcmask 1043459
    %v135 = vsel %vm134, %v113, %v133
    %v136 = vsel %vm130, %v121, %v117
    %v137 = vsel %vm132, %v125, %v136
    %v138 = vsel %vm134, %v129, %v137
    %vm141 = vcmask 11264
    %v142 = vsel %vm141, %v135, 0.0
    %143 = vadd.xlane.f32.xlu0 %v142
    %v144 = vpop.xlane.xlu0 %143
    %v145 = vsel %vm141, %v138, 0.0
    %146 = vadd.xlane.f32.xlu0 %v145
    %v147 = vpop.xlane.xlu0 %146
    %v148 = vld [vmem:[#allocation2] sm:$0x3]
    %v151 = vlaneseq
    %v152 = vshrl.u32 %v151, 7
    %v153 = vsub.s32 %v97, %v152
    %v154 = vrot.slane %v144, %v153
    %v155 = vlaneseq
    %v156 = vshrl.u32 %v155, 7
    %v157 = vsub.s32 %v97, %v156
    %v158 = vrot.slane %v147, %v157
    %v159 = vsel %vm130, %v158, %v154
    %v161 = vadd.f32 %v148, %v159
    %vm162 = vcmask 25600
    %163 = vst.msk [vmem:[#allocation2] sm:$0x3] %vm162, %v161
    // Predicated region
    $region26: #{tpu_custom_call.1} parent=1 // pred_check
      %p164 = pneg %p41
    $region27: #{tpu_custom_call.1} parent=1 // pred_check_branch
      %166 = sbr.rel (%p164) target = $region29
    $region28: #{tpu_custom_call.1} parent=1 // pred_region
      %v167 = vld [vmem:[#allocation2] sm:$0x3]
      %v168 = vmul.f32 %v167, 0.00390625
      %v169 = vld [vmem:[#allocation6] sm:$0xf]
      %v170 = vld [vmem:[%s2] sm:$0x1]
      %v172 = vlaneseq
      %v173 = vshrl.u32 %v172, 7
      %v174 = vsub.s32 0, %v173
      %v175 = vrot.slane %v170, %v174
      %vm177 = vcmask 31744
      %v179 = vsel %vm177, %v168, 0
      %vm181 = vcmask 1043456
      %v183 = vsel %vm181, %v169, 0
      %185 = vmatprep.subr.mxu0 0.0
      %186 = vmatpush1.msra.mxu0 %v183
      %187 = vmatprep.subr.mxu0 0.0
      %188 = vmatpush1.msra.mxu0 0.0
      %189 = vmatprep.subr.mxu0 0.0
      %190 = vmatpush1.msra.mxu0 0.0
      %191 = vmatprep.subr.mxu0 0.0
      %192 = vmatpush1.msra.mxu0 0.0
      %193 = vmatprep.subr.mxu0 0.0
      %194 = vmatpush1.msra.mxu0 0.0
      %195 = vmatprep.subr.mxu0 0.0
      %196 = vmatpush1.msra.mxu0 0.0
      %197 = vmatprep.subr.mxu0 0.0
      %198 = vmatpush1.msra.mxu0 0.0
      %199 = vmatprep.subr.mxu0 0.0
      %200 = vmatpush1.msra.mxu0 0.0
      %201 = vmatprep.subr.mxu0 0.0
      %202 = vmatpush1.msra.mxu0 0.0
      %203 = vmatprep.subr.mxu0 0.0
      %204 = vmatpush1.msra.mxu0 0.0
      %205 = vmatprep.subr.mxu0 0.0
      %206 = vmatpush1.msra.mxu0 0.0
      %207 = vmatprep.subr.mxu0 0.0
      %208 = vmatpush1.msra.mxu0 0.0
      %209 = vmatprep.subr.mxu0 0.0
      %210 = vmatpush1.msra.mxu0 0.0
      %211 = vmatprep.subr.mxu0 0.0
      %212 = vmatpush1.msra.mxu0 0.0
      %213 = vmatprep.subr.mxu0 0.0
      %214 = vmatpush1.msra.mxu0 0.0
      %215 = vmatprep.subr.mxu0 0.0
      %216 = vmatpush1.msra.mxu0 0.0
      %217 = vmatprep.subr.mxu0 0.0
      %218 = vmatpush1.msra.mxu0 0.0
      %219 = vmatprep.subr.mxu0 0.0
      %220 = vmatpush1.msra.mxu0 0.0
      %221 = vmatprep.subr.mxu0 0.0
      %222 = vmatpush1.msra.mxu0 0.0
      %223 = vmatprep.subr.mxu0 0.0
      %224 = vmatpush1.msra.mxu0 0.0
      %225 = vmatprep.subr.mxu0 0.0
      %226 = vmatpush1.msra.mxu0 0.0
      %227 = vmatprep.subr.mxu0 0.0
      %228 = vmatpush1.msra.mxu0 0.0
      %229 = vmatprep.subr.mxu0 0.0
      %230 = vmatpush1.msra.mxu0 0.0
      %231 = vmatprep.subr.mxu0 0.0
      %232 = vmatpush1.msra.mxu0 0.0
      %233 = vmatprep.subr.mxu0 0.0
      %234 = vmatpush1.msra.mxu0 0.0
      %235 = vmatprep.subr.mxu0 0.0
      %236 = vmatpush1.msra.mxu0 0.0
      %237 = vmatprep.subr.mxu0 0.0
      %238 = vmatpush1.msra.mxu0 0.0
      %239 = vmatprep.subr.mxu0 0.0
      %240 = vmatpush1.msra.mxu0 0.0
      %241 = vmatprep.subr.mxu0 0.0
      %242 = vmatpush1.msra.mxu0 0.0
      %243 = vmatprep.subr.mxu0 0.0
      %244 = vmatpush1.msra.mxu0 0.0
      %245 = vmatprep.subr.mxu0 0.0
      %246 = vmatpush1.msra.mxu0 0.0
      %247 = vmatprep.subr.mxu0 0.0
      %248 = vmatpush1.msra.mxu0 0.0
      %249 = vmatprep.mubr.f32.mxu0 0.0
      %250 = vmatmul.mubr.f32.gmra.mrb[0].mxu0 %v179
      %v251 = vpop.f32.mrb[0].mxu0
      %v252 = vadd.f32 %v175, %v251
      %v253 = vpop.f32.mrb[0].mxu0
      %254 = vdwg.mxu0
      %255 = vst [vmem:[#allocation8] sm:$0x3] %v252
    $region29: #{tpu_custom_call.1} parent=1 // pred_fallthru
      _
    // Predicated region
    $region30: #{tpu_custom_call.1} parent=1 // pred_check
      _
    $region31: #{tpu_custom_call.1} parent=1 // pred_check_branch
      %257 = sbr.rel (0) target = $region33
    $region32: #{tpu_custom_call.1} parent=1 // pred_region
      %s259 = ssub.s32 32, 32
      %260 = vsyncadd [#allocation5], %s259
      %s262 = sshll.u32 [#allocation8], 4
      %s263 = int_to_ptr.vmem [resolvable:$true] %s262
      %265 = dma.vmem_to_hbm [thread:$0]  %s263, 32, %s3, [#allocation5]
    $region33: #{tpu_custom_call.1} parent=1 // pred_fallthru
      _
    // Predicated region
    $region34: #{tpu_custom_call.1} parent=1 // pred_check
      _
    $region35: #{tpu_custom_call.1} parent=1 // pred_check_branch
      %267 = sbr.rel (0) target = $region37
    $region36: #{tpu_custom_call.1} parent=1 // pred_region
      %268 = dma.done [#allocation5], 32
    $region37: #{tpu_custom_call.1} parent=1 // pred_fallthru
      _
    %269 = vsyncpa [#allocation4], 1
    %270 = vsyncpa [#allocation7], 1
    %271 = vsyncpa [#allocation5], 1

</llo_original>
